<compile_context>
chip_gen: v7x
topology: tpu7x:2x2x1
jax: 0.10.0
libtpu: 0.0.40
codegen_flags: <defaults>
</compile_context>

<pallas_src>
import functools

import jax
import jax.numpy as jnp
from jax import lax
from jax.experimental import pallas as pl
from jax.experimental.pallas import tpu as pltpu


# ---------------------------------------------------------------------------
# Kernels
# ---------------------------------------------------------------------------

def _matmul_precision(dtype):
    # Full-precision MXU passes for f32 inputs (matches an f32 reference);
    # native low-precision path for bf16.
    return lax.Precision.HIGHEST if dtype == jnp.float32 else None


def _softmax_weights(scores, axis, out_dtype):
    """Numerically-stable softmax of an f32 score tile.

    For bf16 outputs the exp / normalization of the large tile run in bf16
    (v6e/v7x bf16 EUP path; accuracy bounded by the output dtype anyway); the
    row-sum and reciprocal stay in f32.  The reciprocal is exact: the
    denominator is a tiny (.., 1) tensor so approx buys nothing.
    """
    lowp = out_dtype == jnp.bfloat16
    compute_dt = jnp.bfloat16 if lowp else jnp.float32
    m = jnp.max(scores, axis=axis, keepdims=True)
    p = jnp.exp((scores - m).astype(compute_dt))
    denom = jnp.sum(p, axis=axis, keepdims=True, dtype=jnp.float32)
    inv = (1.0 / denom).astype(compute_dt)          # exact reciprocal
    return p * inv                                  # single pass over the tile


def _attn_softmax_keys_kernel(q_ref, k_ref, v_ref, x_ref, w_ref):
    """dim=-1/2 path: one grid step = BT batches x TQ queries, full Lk resident."""
    q = q_ref[...]                                   # (BT, TQ, D)
    k = k_ref[...]                                   # (BT, Lk, D)
    v = v_ref[...]                                   # (BT, Lk, Dv)
    prec = _matmul_precision(q.dtype)

    # scores[b] = q[b] @ k[b]^T -- contract on D directly (no k transpose).
    scores = lax.dot_general(
        q, k, (((2,), (2,)), ((0,), (0,))),
        preferred_element_type=jnp.float32, precision=prec)   # (BT, TQ, Lk)

    weights = _softmax_weights(scores, axis=2, out_dtype=w_ref.dtype)

    out = lax.dot_general(
        weights.astype(v.dtype), v, (((2,), (1,)), ((0,), (0,))),
        preferred_element_type=jnp.float32, precision=prec)   # (BT, TQ, Dv)

    w_ref[...] = weights.astype(w_ref.dtype)
    x_ref[...] = out.astype(x_ref.dtype)


def _attn_softmax_queries_kernel(q_ref, k_ref, v_ref, x_ref, w_ref, acc_ref):
    """dim=1 path: full Lq resident (reduction axis), keys tiled, PV accumulated."""
    ki = pl.program_id(1)

    q = q_ref[...]                                   # (BT, Lq, D)
    k = k_ref[...]                                   # (BT, TK, D)
    v = v_ref[...]                                   # (BT, TK, Dv)
    prec = _matmul_precision(q.dtype)

    scores = lax.dot_general(
        q, k, (((2,), (2,)), ((0,), (0,))),
        preferred_element_type=jnp.float32, precision=prec)   # (BT, Lq, TK)

    weights = _softmax_weights(scores, axis=1, out_dtype=w_ref.dtype)

    @pl.when(ki == 0)
    def _():
        acc_ref[...] = jnp.zeros_like(acc_ref)

    acc_ref[...] += lax.dot_general(
        weights.astype(v.dtype), v, (((2,), (1,)), ((0,), (0,))),
        preferred_element_type=jnp.float32, precision=prec)   # (BT, Lq, Dv)

    w_ref[...] = weights.astype(w_ref.dtype)

    @pl.when(ki == pl.num_programs(1) - 1)
    def _():
        x_ref[...] = acc_ref[...].astype(x_ref.dtype)


# ---------------------------------------------------------------------------
# Tile / budget selection
# ---------------------------------------------------------------------------

def _vmem_capacity_bytes():
    try:
        info = pltpu.get_tpu_info()
        cap = getattr(info, "vmem_capacity_bytes", None)
        if cap:
            return int(cap)
    except Exception:
        pass
    return 64 << 20      # conservative default: v7x per-TensorCore VMEM


def _choose_q_tile(Lq, Lk, vmem_cap):
    """Query tile (and wrapper-side padding) for the softmax-over-keys path."""
    if Lq <= 256:
        return Lq, 0
    if vmem_cap >= (96 << 20):                   # v5e / v6e: 128 MiB physical
        target = 512 if Lk <= 4096 else 256
    else:                                        # v7x: 64 MiB physical
        target = 256 if Lk < 8192 else 128
    if Lq % target == 0:
        return target, 0
    for cand in (256, 512, 128, 1024, 64):       # clean divisors, MXU-friendly
        if cand <= Lq and Lq % cand == 0:
            return cand, 0
    return target, (-Lq) % target                # pad Lq; slice outputs after


def _choose_k_tile(Lk, vmem_cap):
    """Key tile for the softmax-over-queries path."""
    if Lk <= 512:
        return Lk
    cands = (512, 256, 128) if vmem_cap >= (96 << 20) else (256, 128, 512)
    for cand in cands:
        if Lk % cand == 0:
            return cand
    # TODO(synk): pad Lk (zero keys/values contribute nothing) for awkward Lk.
    return Lk


def _choose_batch_tile(B, per_batch_bytes, budget_bytes, max_bt):
    bt = 1
    for cand in range(1, min(B, max_bt) + 1):
        if B % cand == 0 and cand * per_batch_bytes <= budget_bytes:
            bt = cand
    return bt


def _vmem_limit(needed, cap):
    return int(min(3 * cap // 4,
                   max(32 << 20, needed + needed // 4 + (2 << 20))))


# ---------------------------------------------------------------------------
# Public wrapper
# ---------------------------------------------------------------------------

def attention(query, key, value, dim=-1):
    """Pallas equivalent of the PyTorch Attention module.

    query: (B, Lq, D), key: (B, Lk, D), value: (B, Lk, Dv)
    dim:   softmax dim over the (B, Lq, Lk) score tensor (1, 2 or -1).
    Returns (x, weights) with x: (B, Lq, Dv), weights: (B, Lq, Lk).
    """
    B, Lq, D = query.shape
    Bk, Lk, Dk = key.shape
    Bv, Lkv, Dv = value.shape
    assert B == Bk == Bv and D == Dk and Lk == Lkv

    norm_dim = dim % 3
    assert norm_dim in (1, 2), "softmax over the batch dim is not supported"

    x_dt = query.dtype
    w_dt = query.dtype               # torch.softmax keeps the input dtype
    in_bytes = jnp.dtype(query.dtype).itemsize
    w_bytes = jnp.dtype(w_dt).itemsize
    x_bytes = jnp.dtype(x_dt).itemsize

    cap = _vmem_capacity_bytes()
    # Per-step block budget: a quarter of physical VMEM, capped at 32 MiB
    # (v5e/v6e -> 32 MiB, v7x -> 16 MiB).
    budget = max(4 << 20, min(32 << 20, cap // 4))

    cost = pl.CostEstimate(
        flops=2 * B * Lq * Lk * (D + Dv),
        transcendentals=B * Lq * Lk,
        bytes_accessed=((B * Lq * D + B * Lk * D + B * Lk * Dv) * in_bytes
                        + B * Lq * Dv * x_bytes + B * Lq * Lk * w_bytes),
    )

    if norm_dim == 2:
        # ---- softmax over keys: tile (batch, queries), full Lk resident ----
        TQ, pad_q = _choose_q_tile(Lq, Lk, cap)
        Lq_p = Lq + pad_q
        q_in = jnp.pad(query, ((0, 0), (0, pad_q), (0, 0))) if pad_q else query

        # Per-batch-row VMEM per grid step: double-buffered blocks + ~3 f32
        # copies of the (TQ, Lk) score/probability tile + f32 out accumulator.
        per_batch = (2 * (TQ * D + Lk * D + Lk * Dv) * in_bytes
                     + 2 * TQ * Dv * x_bytes + 2 * TQ * Lk * w_bytes
                     + 3 * TQ * Lk * 4 + TQ * Dv * 4)

        inner_steps = Lq_p // TQ
        # Guarantee >= 2 grid steps so both v7x TensorCores get work.
        max_bt = (B // 2) if (inner_steps == 1 and B >= 2) else B
        BT = _choose_batch_tile(B, per_batch, budget, max_bt)
        grid = (B // BT, inner_steps)

        # If the batch axis alone can feed both cores, keep the query axis
        # "arbitrary" so the resident K/V block is never re-fetched per q-tile.
        dims_sem = (("parallel", "arbitrary")
                    if (grid[0] >= 2 or grid[1] == 1)
                    else ("parallel", "parallel"))

        vmem_limit = _vmem_limit(BT * per_batch, cap)

        x_p, w_p = pl.pallas_call(
            _attn_softmax_keys_kernel,
            out_shape=(
                jax.ShapeDtypeStruct((B, Lq_p, Dv), x_dt),   # x
                jax.ShapeDtypeStruct((B, Lq_p, Lk), w_dt),   # weights
            ),
            grid_spec=pltpu.PrefetchScalarGridSpec(
                num_scalar_prefetch=0,
                grid=grid,
                in_specs=[
                    pl.BlockSpec((BT, TQ, D), lambda b, i: (b, i, 0)),
                    pl.BlockSpec((BT, Lk, D), lambda b, i: (b, 0, 0)),
                    pl.BlockSpec((BT, Lk, Dv), lambda b, i: (b, 0, 0)),
                ],
                out_specs=[
                    pl.BlockSpec((BT, TQ, Dv), lambda b, i: (b, i, 0)),
                    pl.BlockSpec((BT, TQ, Lk), lambda b, i: (b, i, 0)),
                ],
            ),
            compiler_params=pltpu.CompilerParams(
                dimension_semantics=dims_sem,
                vmem_limit_bytes=vmem_limit,
            ),
            cost_estimate=cost,
        )(q_in, key, value)

        if pad_q:
            x_p = x_p[:, :Lq, :]
            w_p = w_p[:, :Lq, :]
        return x_p, w_p

    # ---- softmax over queries (dim=1): full Lq resident, tile keys ----
    TK = _choose_k_tile(Lk, cap)
    per_batch = (2 * (Lq * D + TK * D + TK * Dv) * in_bytes
                 + 2 * Lq * Dv * x_bytes + 2 * Lq * TK * w_bytes
                 + 3 * Lq * TK * 4 + Lq * Dv * 4)   # + f32 PV accumulator

    # Key axis carries the accumulator ("arbitrary"), so the batch axis is the
    # only core-parallel axis -> keep it >= 2 steps when possible (v7x).
    max_bt = (B // 2) if B >= 2 else B
    BT = _choose_batch_tile(B, per_batch, budget, max_bt)
    grid = (B // BT, Lk // TK)
    vmem_limit = _vmem_limit(BT * per_batch, cap)

    return pl.pallas_call(
        _attn_softmax_queries_kernel,
        out_shape=(
            jax.ShapeDtypeStruct((B, Lq, Dv), x_dt),   # x
            jax.ShapeDtypeStruct((B, Lq, Lk), w_dt),   # weights
        ),
        grid_spec=pltpu.PrefetchScalarGridSpec(
            num_scalar_prefetch=0,
            grid=grid,
            in_specs=[
                pl.BlockSpec((BT, Lq, D), lambda b, k: (b, 0, 0)),
                pl.BlockSpec((BT, TK, D), lambda b, k: (b, k, 0)),
                pl.BlockSpec((BT, TK, Dv), lambda b, k: (b, k, 0)),
            ],
            out_specs=[
                pl.BlockSpec((BT, Lq, Dv), lambda b, k: (b, 0, 0)),
                pl.BlockSpec((BT, Lq, TK), lambda b, k: (b, 0, k)),
            ],
            scratch_shapes=[pltpu.VMEM((BT, Lq, Dv), jnp.float32)],
        ),
        compiler_params=pltpu.CompilerParams(
            dimension_semantics=("parallel", "arbitrary"),
            vmem_limit_bytes=vmem_limit,
        ),
        cost_estimate=cost,
    )(query, key, value)


# ---------------------------------------------------------------------------
# Pure-JAX reference and self-test
# ---------------------------------------------------------------------------

def attention_ref(query, key, value, dim=-1):
    prec = _matmul_precision(query.dtype)
    scores = jnp.einsum("bqd,bkd->bqk", query, key, precision=prec)
    weights = jax.nn.softmax(scores, axis=dim)
    x = jnp.einsum("bqk,bkd->bqd", weights, value, precision=prec)
    return x, weights


if __name__ == "__main__":
    B, Lq, Lk, D, Dv = 2, 8, 8, 32, 32
    key0 = jax.random.PRNGKey(0)
    kq, kk, kv = jax.random.split(key0, 3)
    query = jax.random.normal(kq, (B, Lq, D), dtype=jnp.float32)
    key_t = jax.random.normal(kk, (B, Lk, D), dtype=jnp.float32)
    value = jax.random.normal(kv, (B, Lk, Dv), dtype=jnp.float32)

    # dim=-1: softmax over keys (usual attention); dim=1: softmax over queries.
    for dim in (-1, 1):
        x, weights = attention(query, key_t, value, dim=dim)
        x = jax.block_until_ready(x)
        weights = jax.block_until_ready(weights)
        x_ref, w_ref = attention_ref(query, key_t, value, dim=dim)
        assert x.shape == (B, Lq, Dv) and weights.shape == (B, Lq, Lk)
        assert jnp.allclose(x, x_ref, atol=2e-3, rtol=2e-3), f"x mismatch, dim={dim}"
        assert jnp.allclose(weights, w_ref, atol=2e-3, rtol=2e-3), f"w mismatch, dim={dim}"

    print("KERNEL_OK")
</pallas_src>

<mosaic_0001>
module attributes {stable_mosaic.version = 11 : i64} {
  func.func @_attn_softmax_keys_kernel(%arg0: i32, %arg1: i32, %arg2: memref<1x8x32xf32, #tpu.memory_space<vmem>>, %arg3: memref<1x8x32xf32, #tpu.memory_space<vmem>>, %arg4: memref<1x8x32xf32, #tpu.memory_space<vmem>>, %arg5: memref<1x8x32xf32, #tpu.memory_space<vmem>>, %arg6: memref<1x8x8xf32, #tpu.memory_space<vmem>>) attributes {dimension_semantics = [#tpu.dimension_semantics<parallel>, #tpu.dimension_semantics<arbitrary>], iteration_bounds = array<i64: 2, 1>, scalar_prefetch = 0 : i64, scratch_operands = 0 : i64, tpu.core_type = #tpu.core_type<tc>, window_params = [{transform_indices = @transform_0, window_bounds = array<i64: 1, 8, 32>}, {transform_indices = @transform_1, window_bounds = array<i64: 1, 8, 32>}, {transform_indices = @transform_2, window_bounds = array<i64: 1, 8, 32>}, {transform_indices = @transform_3, window_bounds = array<i64: 1, 8, 32>}, {transform_indices = @transform_4, window_bounds = array<i64: 1, 8, 8>}]} {
    %c0 = arith.constant 0 : index
    %c0_0 = arith.constant 0 : index
    %c0_1 = arith.constant 0 : index
    %0 = vector.load %arg2[%c0, %c0_0, %c0_1] : memref<1x8x32xf32, #tpu.memory_space<vmem>>, vector<1x8x32xf32>
    %c0_2 = arith.constant 0 : index
    %c0_3 = arith.constant 0 : index
    %c0_4 = arith.constant 0 : index
    %1 = vector.load %arg3[%c0_2, %c0_3, %c0_4] : memref<1x8x32xf32, #tpu.memory_space<vmem>>, vector<1x8x32xf32>
    %c0_5 = arith.constant 0 : index
    %c0_6 = arith.constant 0 : index
    %c0_7 = arith.constant 0 : index
    %2 = vector.load %arg4[%c0_5, %c0_6, %c0_7] : memref<1x8x32xf32, #tpu.memory_space<vmem>>, vector<1x8x32xf32>
    %cst = arith.constant dense<0.000000e+00> : vector<1x8x8xf32>
    %3 = tpu.matmul %0, %1, %cst {dimension_numbers = #tpu.dot_dimension_numbers<[2], [2], [1], [1], [0, 0, 0, 1, 1, 1], [0], [0]>, precision = #tpu.contract_precision<fp32>} : vector<1x8x32xf32>, vector<1x8x32xf32>, vector<1x8x8xf32> -> vector<1x8x8xf32>
    %cst_8 = arith.constant dense<0xFF800000> : vector<1x8xf32>
    %4 = vector.multi_reduction <maximumf>, %3, %cst_8 [2] : vector<1x8x8xf32> to vector<1x8xf32>
    %5 = vector.shape_cast %4 : vector<1x8xf32> to vector<1x8x1xf32>
    %6 = vector.broadcast %5 : vector<1x8x1xf32> to vector<1x8x8xf32>
    %7 = arith.subf %3, %6 : vector<1x8x8xf32>
    %8 = math.exp %7 : vector<1x8x8xf32>
    %cst_9 = arith.constant dense<0.000000e+00> : vector<1x8xf32>
    %9 = vector.multi_reduction <add>, %8, %cst_9 [2] : vector<1x8x8xf32> to vector<1x8xf32>
    %10 = vector.shape_cast %9 : vector<1x8xf32> to vector<1x8x1xf32>
    %cst_10 = arith.constant 1.000000e+00 : f32
    %11 = vector.broadcast %cst_10 : f32 to vector<1x8x1xf32>
    %12 = arith.divf %11, %10 : vector<1x8x1xf32>
    %13 = vector.broadcast %12 : vector<1x8x1xf32> to vector<1x8x8xf32>
    %14 = arith.mulf %8, %13 : vector<1x8x8xf32>
    %cst_11 = arith.constant dense<0.000000e+00> : vector<1x8x32xf32>
    %15 = tpu.matmul %14, %2, %cst_11 {dimension_numbers = #tpu.dot_dimension_numbers<[2], [1], [1], [2], [0, 0, 0, 1, 1, 2], [0], [0]>, precision = #tpu.contract_precision<fp32>} : vector<1x8x8xf32>, vector<1x8x32xf32>, vector<1x8x32xf32> -> vector<1x8x32xf32>
    %c0_12 = arith.constant 0 : index
    %c0_13 = arith.constant 0 : index
    %c0_14 = arith.constant 0 : index
    %16 = vector.load %arg6[%c0_12, %c0_13, %c0_14] : memref<1x8x8xf32, #tpu.memory_space<vmem>>, vector<1x8x8xf32>
    tpu.vector_store %arg6[%c0_12, %c0_13, %c0_14], %14 {strides = array<i32>} : memref<1x8x8xf32, #tpu.memory_space<vmem>>, vector<1x8x8xf32>,
    %c0_15 = arith.constant 0 : index
    %c0_16 = arith.constant 0 : index
    %c0_17 = arith.constant 0 : index
    %17 = vector.load %arg5[%c0_15, %c0_16, %c0_17] : memref<1x8x32xf32, #tpu.memory_space<vmem>>, vector<1x8x32xf32>
    tpu.vector_store %arg5[%c0_15, %c0_16, %c0_17], %15 {strides = array<i32>} : memref<1x8x32xf32, #tpu.memory_space<vmem>>, vector<1x8x32xf32>,
    return
  }
  func.func @transform_0(%arg0: i32, %arg1: i32) -> (i32, i32, i32) {
    %c0_i32 = arith.constant 0 : i32
    %c0_i32_0 = arith.constant 0 : i32
    return %arg0, %arg1, %c0_i32 : i32, i32, i32
  }
  func.func @transform_1(%arg0: i32, %arg1: i32) -> (i32, i32, i32) {
    %c0_i32 = arith.constant 0 : i32
    %c0_i32_0 = arith.constant 0 : i32
    %c0_i32_1 = arith.constant 0 : i32
    return %arg0, %c0_i32, %c0_i32_0 : i32, i32, i32
  }
  func.func @transform_2(%arg0: i32, %arg1: i32) -> (i32, i32, i32) {
    %c0_i32 = arith.constant 0 : i32
    %c0_i32_0 = arith.constant 0 : i32
    %c0_i32_1 = arith.constant 0 : i32
    return %arg0, %c0_i32, %c0_i32_0 : i32, i32, i32
  }
  func.func @transform_3(%arg0: i32, %arg1: i32) -> (i32, i32, i32) {
    %c0_i32 = arith.constant 0 : i32
    %c0_i32_0 = arith.constant 0 : i32
    return %arg0, %arg1, %c0_i32 : i32, i32, i32
  }
  func.func @transform_4(%arg0: i32, %arg1: i32) -> (i32, i32, i32) {
    %c0_i32 = arith.constant 0 : i32
    %c0_i32_0 = arith.constant 0 : i32
    return %arg0, %arg1, %c0_i32 : i32, i32, i32
  }
}

</mosaic_0001>

<llo_original>
// kernel: tpu_custom_call.1
$region0: #{tpu_custom_call.1}
  #allocation0 [shape = 'u32[]', space=smem, size = 0x4, offset = 0x4, fixed_abs, tag = 'smem constant byte address 0x4 - core index']
  #allocation1 [shape = 'u32[144,128]{1,0:T(1,128)}', space=vmem, size = 0x12000, scoped, tag = 'internal scratch']
  %s0 = inlined_call_operand.hbm [shape: f32[2,8,32], index: 0, kind: input, shape index: {}]
  %s1 = inlined_call_operand.hbm [shape: f32[2,8,32], index: 1, kind: input, shape index: {}]
  %s2 = inlined_call_operand.hbm [shape: f32[2,8,32], index: 2, kind: input, shape index: {}]
  %s3 = inlined_call_operand.hbm [shape: f32[2,8,32], index: 3, kind: output, shape index: {0}]
  %s4 = inlined_call_operand.hbm [shape: f32[2,8,8], index: 4, kind: output, shape index: {1}]
  %5 = xla_tuple %s3, %s4
  %s6 = sld [smem:[#allocation0]]
  $region65: #{tpu_custom_call.1} parent=0
    _
  %s8 = ssub.s32 1, %s6
  %s9 = scalar_select 0, %s8, %s6
  $region1: #{tpu_custom_call.1} parent=0
    #allocation2 [shape = 'u8[8192]{0}', space=vmem, size = 0x2000, scoped, tag = 'input window, operand 0']
    #allocation3 [shape = 's32[2]{0}', space=sflag, size = 0x8, scoped, tag = 'scoped memory for tpu_custom_call.1']
    #allocation4 [shape = 's32[2]{0}', space=sflag, size = 0x8, scoped, tag = 'scoped memory for tpu_custom_call.1']
    #allocation5 [shape = 'u8[8192]{0}', space=vmem, size = 0x2000, scoped, tag = 'input window, operand 1']
    #allocation6 [shape = 's32[2]{0}', space=sflag, size = 0x8, scoped, tag = 'scoped memory for tpu_custom_call.1']
    #allocation7 [shape = 'u8[8192]{0}', space=vmem, size = 0x2000, scoped, tag = 'input window, operand 2']
    #allocation8 [shape = 'u8[8192]{0}', space=vmem, size = 0x2000, scoped, tag = 'output window, operand 0']
    #allocation9 [shape = 'u8[8192]{0}', space=vmem, size = 0x2000, scoped, tag = 'output window, operand 1']
    #allocation10 [shape = 's32[2]{0}', space=sflag, size = 0x8, scoped, tag = 'scoped memory for tpu_custom_call.1']
    %10 = vsyncpa [#allocation3], 0
    %s11 = scalar_lea.sflag [#allocation3], 1
    %12 = vsyncpa %s11, 0
    %13 = vsyncpa [#allocation6], 0
    %s14 = scalar_lea.sflag [#allocation6], 1
    %15 = vsyncpa %s14, 0
    %16 = vsyncpa [#allocation4], 0
    %s17 = scalar_lea.sflag [#allocation4], 1
    %18 = vsyncpa %s17, 0
    %19 = vsyncpa [#allocation10], 0
    %s20 = scalar_lea.sflag [#allocation10], 1
    %21 = vsyncpa %s20, 0
    loop: start=0, step=1, limit=4
    $region2: #{tpu_custom_call.1} parent=1 // loop_pre_header
      _
    $region3: #{tpu_custom_call.1} parent=1 // loop_header
      %s23 = sphi 0, %s27
      %p24 = scmp.ge.s32.totalorder %s23, 4
      %s30 = sphi 0, %s42
      %s31 = sphi 0, %s38
      %s32 = sphi 0, %s30
      %s33 = sphi 0, %s31
      %s34 = sphi 0, %s32
      %s35 = sphi 0, %s33
      %s47 = sphi 0, %s49
      %s50 = sphi 0, %s47
      %s51 = sphi 0, %s50
      %s67 = sphi 0, %s51
      %s73 = sphi 0, %s75
      %s76 = sphi 0, %s73
      %s77 = sphi 0, %s76
      %s93 = sphi 0, %s77
      %s99 = sphi 0, %s101
      %s102 = sphi 0, %s99
      %s103 = sphi 0, %s102
      %s119 = sphi 0, %s103
      %s127 = sphi 0, %s129
      %s130 = sphi 0, %s127
      %s131 = sphi 0, %s130
      %s147 = sphi 0, %s131
      %s155 = sphi 0, %s157
      %s158 = sphi 0, %s155
      %s159 = sphi 0, %s158
      %s175 = sphi 0, %s159
    $region4: #{tpu_custom_call.1} parent=1 // loop_header_branch
      %26 = sbr.rel (%p24) target = $region8
    $region5: #{tpu_custom_call.1} parent=1 // loop_body
      %s28 = ssub.s32 %s23, 1
      %s29 = ssub.s32 %s23, 2
      %s36 = sadd.s32 1, %s31
      %p37 = scmp.ge.s32.totalorder %s36, 1
      %s38 = scalar_select %p37, 0, %s36
      %s39 = sadd.s32 1, %s30
      %s40 = scalar_select %p37, %s39, %s30
      %p41 = scmp.ge.s32.totalorder %s40, 2
      %s42 = scalar_select %p41, 0, %s40
      %s43 = ssub.s32 %s30, %s42
      %s44 = ssub.s32 %s31, %s38
      %s45 = sor.u32 %s43, %s44
      %p46 = scmp.eq.s32.totalorder %s45, 0
      %s48 = sadd.s32 %s47, 1
      %s49 = scalar_select %p46, %s47, %s48
      %p52 = pneg %p46
      %p53 = scmp.eq.s32.totalorder %s23, 1
      %p54 = por %p52, %p53
      %p55 = scmp.ne.s32.totalorder %s47, %s50
      %p56 = scmp.eq.s32.totalorder %s23, 0
      %p57 = por %p55, %p56
      %p58 = scmp.ne.s32.totalorder %s47, %s50
      %p59 = scmp.eq.s32.totalorder %s28, 1
      %p60 = por %p58, %p59
      %p61 = scmp.ne.s32.totalorder %s50, %s51
      %p62 = scmp.eq.s32.totalorder %s28, 0
      %p63 = por %p61, %p62
      %p64 = scmp.ne.s32.totalorder %s50, %s51
      %p65 = scmp.eq.s32.totalorder %s29, 1
      %p66 = por %p64, %p65
      %p68 = scmp.ne.s32.totalorder %s51, %s67
      %p69 = scmp.eq.s32.totalorder %s29, 0
      %p70 = por %p68, %p69
      %s71 = ssub.s32 %s30, %s42
      %p72 = scmp.eq.s32.totalorder %s71, 0
      %s74 = sadd.s32 %s73, 1
      %s75 = scalar_select %p72, %s73, %s74
      %p78 = pneg %p72
      %p79 = scmp.eq.s32.totalorder %s23, 1
      %p80 = por %p78, %p79
      %p81 = scmp.ne.s32.totalorder %s73, %s76
      %p82 = scmp.eq.s32.totalorder %s23, 0
      %p83 = por %p81, %p82
      %p84 = scmp.ne.s32.totalorder %s73, %s76
      %p85 = scmp.eq.s32.totalorder %s28, 1
      %p86 = por %p84, %p85
      %p87 = scmp.ne.s32.totalorder %s76, %s77
      %p88 = scmp.eq.s32.totalorder %s28, 0
      %p89 = por %p87, %p88
      %p90 = scmp.ne.s32.totalorder %s76, %s77
      %p91 = scmp.eq.s32.totalorder %s29, 1
      %p92 = por %p90, %p91
      %p94 = scmp.ne.s32.totalorder %s77, %s93
      %p95 = scmp.eq.s32.totalorder %s29, 0
      %p96 = por %p94, %p95
      %s97 = ssub.s32 %s30, %s42
      %p98 = scmp.eq.s32.totalorder %s97, 0
      %s100 = sadd.s32 %s99, 1
      %s101 = scalar_select %p98, %s99, %s100
      %p104 = pneg %p98
      %p105 = scmp.eq.s32.totalorder %s23, 1
      %p106 = por %p104, %p105
      %p107 = scmp.ne.s32.totalorder %s99, %s102
      %p108 = scmp.eq.s32.totalorder %s23, 0
      %p109 = por %p107, %p108
      %p110 = scmp.ne.s32.totalorder %s99, %s102
      %p111 = scmp.eq.s32.totalorder %s28, 1
      %p112 = por %p110, %p111
      %p113 = scmp.ne.s32.totalorder %s102, %s103
      %p114 = scmp.eq.s32.totalorder %s28, 0
      %p115 = por %p113, %p114
      %p116 = scmp.ne.s32.totalorder %s102, %s103
      %p117 = scmp.eq.s32.totalorder %s29, 1
      %p118 = por %p116, %p117
      %p120 = scmp.ne.s32.totalorder %s103, %s119
      %p121 = scmp.eq.s32.totalorder %s29, 0
      %p122 = por %p120, %p121
      %s123 = ssub.s32 %s30, %s42
      %s124 = ssub.s32 %s31, %s38
      %s125 = sor.u32 %s123, %s124
      %p126 = scmp.eq.s32.totalorder %s125, 0
      %s128 = sadd.s32 %s127, 1
      %s129 = scalar_select %p126, %s127, %s128
      %p132 = pneg %p126
      %p133 = scmp.eq.s32.totalorder %s23, 1
      %p134 = por %p132, %p133
      %p135 = scmp.ne.s32.totalorder %s127, %s130
      %p136 = scmp.eq.s32.totalorder %s23, 0
      %p137 = por %p135, %p136
      %p138 = scmp.ne.s32.totalorder %s127, %s130
      %p139 = scmp.eq.s32.totalorder %s28, 1
      %p140 = por %p138, %p139
      %p141 = scmp.ne.s32.totalorder %s130, %s131
      %p142 = scmp.eq.s32.totalorder %s28, 0
      %p143 = por %p141, %p142
      %p144 = scmp.ne.s32.totalorder %s130, %s131
      %p145 = scmp.eq.s32.totalorder %s29, 1
      %p146 = por %p144, %p145
      %p148 = scmp.ne.s32.totalorder %s131, %s147
      %p149 = scmp.eq.s32.totalorder %s29, 0
      %p150 = por %p148, %p149
      %s151 = ssub.s32 %s30, %s42
      %s152 = ssub.s32 %s31, %s38
      %s153 = sor.u32 %s151, %s152
      %p154 = scmp.eq.s32.totalorder %s153, 0
      %s156 = sadd.s32 %s155, 1
      %s157 = scalar_select %p154, %s155, %s156
      %p160 = pneg %p154
      %p161 = scmp.eq.s32.totalorder %s23, 1
      %p162 = por %p160, %p161
      %p163 = scmp.ne.s32.totalorder %s155, %s158
      %p164 = scmp.eq.s32.totalorder %s23, 0
      %p165 = por %p163, %p164
      %p166 = scmp.ne.s32.totalorder %s155, %s158
      %p167 = scmp.eq.s32.totalorder %s28, 1
      %p168 = por %p166, %p167
      %p169 = scmp.ne.s32.totalorder %s158, %s159
      %p170 = scmp.eq.s32.totalorder %s28, 0
      %p171 = por %p169, %p170
      %p172 = scmp.ne.s32.totalorder %s158, %s159
      %p173 = scmp.eq.s32.totalorder %s29, 1
      %p174 = por %p172, %p173
      %p176 = scmp.ne.s32.totalorder %s159, %s175
      %p177 = scmp.eq.s32.totalorder %s29, 0
      %p178 = por %p176, %p177
      %p179 = scmp.le.s32.totalorder 1, %s23
      %p180 = scmp.lt.s32.totalorder %s23, 3
      %p181 = pnand %p179, %p180
      %p182 = pneg %p181
      // Predicated region
      $region9: #{tpu_custom_call.1} parent=5 // pred_check
        _
      $region10: #{tpu_custom_call.1} parent=5 // pred_check_branch
        %184 = sbr.rel (%p181) target = $region12
      $region11: #{tpu_custom_call.1} parent=5 // pred_region
        %s185 = ssub.s32 %s23, 1
      $region12: #{tpu_custom_call.1} parent=5 // pred_fallthru
        _
      %p186 = scmp.lt.s32.totalorder %s23, 2
      // Predicated region
      $region13: #{tpu_custom_call.1} parent=5 // pred_check
        %p187 = pneg %p186
      $region14: #{tpu_custom_call.1} parent=5 // pred_check_branch
        %189 = sbr.rel (%p187) target = $region16
      $region15: #{tpu_custom_call.1} parent=5 // pred_region
        // Predicated region
        $region17: #{tpu_custom_call.1} parent=15 // pred_check
          %p190 = pneg %p57
        $region18: #{tpu_custom_call.1} parent=15 // pred_check_branch
          %192 = sbr.rel (%p190) target = $region20
        $region19: #{tpu_custom_call.1} parent=15 // pred_region
          %s193 = sand.u32 %s47, 1
          %s194 = scalar_lea.sflag [#allocation3], %s193
          %s195 = sand.u32 %s47, 1
          %s196 = smul.addr %s195, 8
          %s197 = scalar_lea.vmem [#allocation2], %s196
          %s199 = ssub.s32 128, 128
          %200 = vsyncadd %s194, %s199
          %s201 = sadd.s32 %s31, %s30
          %s202 = smul.addr %s201, 128
          %s203 = scalar_lea.hbm %s0, %s202
          %s205 = sshll.u32 %s197, 4
          %s206 = int_to_ptr.vmem [resolvable:$true] %s205
          %208 = dma.hbm_to_vmem [thread:$0]  %s203, 128, %s206, %s194
        $region20: #{tpu_custom_call.1} parent=15 // pred_fallthru
          _
        // Predicated region
        $region21: #{tpu_custom_call.1} parent=15 // pred_check
          %p209 = pneg %p83
        $region22: #{tpu_custom_call.1} parent=15 // pred_check_branch
          %211 = sbr.rel (%p209) target = $region24
        $region23: #{tpu_custom_call.1} parent=15 // pred_region
          %s212 = sand.u32 %s23, 1
          %s213 = scalar_lea.sflag [#allocation6], %s212
          %s214 = sand.u32 %s73, 1
          %s215 = smul.addr %s214, 8
          %s216 = scalar_lea.vmem [#allocation5], %s215
          %s218 = ssub.s32 128, 128
          %219 = vsyncadd %s213, %s218
          %s220 = smul.addr %s30, 128
          %s221 = scalar_lea.hbm %s1, %s220
          %s223 = sshll.u32 %s216, 4
          %s224 = int_to_ptr.vmem [resolvable:$true] %s223
          %226 = dma.hbm_to_vmem [thread:$0]  %s221, 128, %s224, %s213
        $region24: #{tpu_custom_call.1} parent=15 // pred_fallthru
          _
        // Predicated region
        $region25: #{tpu_custom_call.1} parent=15 // pred_check
          %p227 = pneg %p109
        $region26: #{tpu_custom_call.1} parent=15 // pred_check_branch
          %229 = sbr.rel (%p227) target = $region28
        $region27: #{tpu_custom_call.1} parent=15 // pred_region
          %s230 = sand.u32 %s23, 1
          %s231 = scalar_lea.sflag [#allocation6], %s230
          %s232 = sand.u32 %s99, 1
          %s233 = smul.addr %s232, 8
          %s234 = scalar_lea.vmem [#allocation7], %s233
          %s236 = ssub.s32 128, 128
          %237 = vsyncadd %s231, %s236
          %s238 = smul.addr %s30, 128
          %s239 = scalar_lea.hbm %s2, %s238
          %s241 = sshll.u32 %s234, 4
          %s242 = int_to_ptr.vmem [resolvable:$true] %s241
          %244 = dma.hbm_to_vmem [thread:$0]  %s239, 128, %s242, %s231
        $region28: #{tpu_custom_call.1} parent=15 // pred_fallthru
          _
      $region16: #{tpu_custom_call.1} parent=5 // pred_fallthru
        _
      %p245 = scmp.le.s32.totalorder 1, %s23
      %p246 = scmp.lt.s32.totalorder %s23, 3
      %p247 = pnand %p245, %p246
      %p248 = pneg %p247
      // Predicated region
      $region29: #{tpu_custom_call.1} parent=5 // pred_check
        _
      $region30: #{tpu_custom_call.1} parent=5 // pred_check_branch
        %250 = sbr.rel (%p247) target = $region32
      $region31: #{tpu_custom_call.1} parent=5 // pred_region
        %s251 = ssub.s32 %s23, 1
        %s252 = sand.u32 %s50, 1
        %s253 = scalar_lea.sflag [#allocation3], %s252
        %s254 = sand.u32 %s50, 1
        %s255 = smul.addr %s254, 8
        %s256 = scalar_lea.vmem [#allocation2], %s255
        // Predicated region
        $region33: #{tpu_custom_call.1} parent=31 // pred_check
          %p257 = pneg %p63
        $region34: #{tpu_custom_call.1} parent=31 // pred_check_branch
          %259 = sbr.rel (%p257) target = $region36
        $region35: #{tpu_custom_call.1} parent=31 // pred_region
          %260 = dma.done %s253, 128
        $region36: #{tpu_custom_call.1} parent=31 // pred_fallthru
          _
        %s261 = sand.u32 %s28, 1
        %s262 = scalar_lea.sflag [#allocation6], %s261
        %s263 = sand.u32 %s76, 1
        %s264 = smul.addr %s263, 8
        %s265 = scalar_lea.vmem [#allocation5], %s264
        // Predicated region
        $region37: #{tpu_custom_call.1} parent=31 // pred_check
          %p266 = pneg %p89
        $region38: #{tpu_custom_call.1} parent=31 // pred_check_branch
          %268 = sbr.rel (%p266) target = $region40
        $region39: #{tpu_custom_call.1} parent=31 // pred_region
          %269 = dma.done %s262, 128
        $region40: #{tpu_custom_call.1} parent=31 // pred_fallthru
          _
        %s270 = sand.u32 %s28, 1
        %s271 = scalar_lea.sflag [#allocation6], %s270
        %s272 = sand.u32 %s102, 1
        %s273 = smul.addr %s272, 8
        %s274 = scalar_lea.vmem [#allocation7], %s273
        // Predicated region
        $region41: #{tpu_custom_call.1} parent=31 // pred_check
          %p275 = pneg %p115
        $region42: #{tpu_custom_call.1} parent=31 // pred_check_branch
          %277 = sbr.rel (%p275) target = $region44
        $region43: #{tpu_custom_call.1} parent=31 // pred_region
          %278 = dma.done %s271, 128
        $region44: #{tpu_custom_call.1} parent=31 // pred_fallthru
          _
        %s279 = sand.u32 %s50, 1
        %s280 = scalar_lea.sflag [#allocation3], %s279
        %s281 = sand.u32 %s50, 1
        %s282 = smul.addr %s281, 8
        %s283 = scalar_lea.vmem [#allocation2], %s282
        %p284 = pneg %p63
        %p285 = pneg %p60
        %s286 = sand.u32 %s28, 1
        %s287 = scalar_lea.sflag [#allocation6], %s286
        %s288 = sand.u32 %s76, 1
        %s289 = smul.addr %s288, 8
        %s290 = scalar_lea.vmem [#allocation5], %s289
        %p291 = pneg %p89
        %p292 = pneg %p86
        %s293 = sand.u32 %s28, 1
        %s294 = scalar_lea.sflag [#allocation6], %s293
        %s295 = sand.u32 %s102, 1
        %s296 = smul.addr %s295, 8
        %s297 = scalar_lea.vmem [#allocation7], %s296
        %p298 = pneg %p115
        %p299 = pneg %p112
        %p300 = pneg %p143
        %p301 = pneg %p140
        %s302 = sand.u32 %s130, 1
        %s303 = scalar_lea.sflag [#allocation4], %s302
        %s304 = sand.u32 %s130, 1
        %s305 = smul.addr %s304, 8
        %s306 = scalar_lea.vmem [#allocation8], %s305
        %p307 = pneg %p171
        %p308 = pneg %p168
        %s309 = sand.u32 %s158, 1
        %s310 = scalar_lea.sflag [#allocation10], %s309
        %s311 = sand.u32 %s158, 1
        %s312 = smul.addr %s311, 8
        %s313 = scalar_lea.vmem [#allocation9], %s312
        %v314 = vld [vmem:[%s256] sm:$0xff]
        %v315 = vld [vmem:[%s265] sm:$0xff]
        %v316 = vld [vmem:[%s274] sm:$0xff]
        %vm317 = vcmask 261120
        %v319 = vsel %vm317, %v314, 0
        %v322 = vsel %vm317, %v315, 0
        %324 = vmatprep.subr.mxu0 0.0
        %v325 = vand.u32 %v322, 4294901760
        %326 = vmatpush1.xpose.msra.mxu0 %v325
        %327 = vmatprep.subr.mxu0 0.0
        %328 = vmatpush1.xpose.msra.mxu0 0.0
        %329 = vmatprep.subr.mxu0 0.0
        %330 = vmatpush1.xpose.msra.mxu0 0.0
        %331 = vmatprep.subr.mxu0 0.0
        %332 = vmatpush1.xpose.msra.mxu0 0.0
        %333 = vmatprep.subr.mxu0 0.0
        %334 = vmatpush1.xpose.msra.mxu0 0.0
        %335 = vmatprep.subr.mxu0 0.0
        %336 = vmatpush1.xpose.msra.mxu0 0.0
        %337 = vmatprep.subr.mxu0 0.0
        %338 = vmatpush1.xpose.msra.mxu0 0.0
        %339 = vmatprep.subr.mxu0 0.0
        %340 = vmatpush1.xpose.msra.mxu0 0.0
        %341 = vmatprep.subr.mxu0 0.0
        %342 = vmatpush1.xpose.msra.mxu0 0.0
        %343 = vmatprep.subr.mxu0 0.0
        %344 = vmatpush1.xpose.msra.mxu0 0.0
        %345 = vmatprep.subr.mxu0 0.0
        %346 = vmatpush1.xpose.msra.mxu0 0.0
        %347 = vmatprep.subr.mxu0 0.0
        %348 = vmatpush1.xpose.msra.mxu0 0.0
        %349 = vmatprep.subr.mxu0 0.0
        %350 = vmatpush1.xpose.msra.mxu0 0.0
        %351 = vmatprep.subr.mxu0 0.0
        %352 = vmatpush1.xpose.msra.mxu0 0.0
        %353 = vmatprep.subr.mxu0 0.0
        %354 = vmatpush1.xpose.msra.mxu0 0.0
        %355 = vmatprep.subr.mxu0 0.0
        %356 = vmatpush1.xpose.msra.mxu0 0.0
        %357 = vmatprep.subr.mxu0 0.0
        %358 = vmatpush1.xpose.msra.mxu0 0.0
        %359 = vmatprep.subr.mxu0 0.0
        %360 = vmatpush1.xpose.msra.mxu0 0.0
        %361 = vmatprep.subr.mxu0 0.0
        %362 = vmatpush1.xpose.msra.mxu0 0.0
        %363 = vmatprep.subr.mxu0 0.0
        %364 = vmatpush1.xpose.msra.mxu0 0.0
        %365 = vmatprep.subr.mxu0 0.0
        %366 = vmatpush1.xpose.msra.mxu0 0.0
        %367 = vmatprep.subr.mxu0 0.0
        %368 = vmatpush1.xpose.msra.mxu0 0.0
        %369 = vmatprep.subr.mxu0 0.0
        %370 = vmatpush1.xpose.msra.mxu0 0.0
        %371 = vmatprep.subr.mxu0 0.0
        %372 = vmatpush1.xpose.msra.mxu0 0.0
        %373 = vmatprep.subr.mxu0 0.0
        %374 = vmatpush1.xpose.msra.mxu0 0.0
        %375 = vmatprep.subr.mxu0 0.0
        %376 = vmatpush1.xpose.msra.mxu0 0.0
        %377 = vmatprep.subr.mxu0 0.0
        %378 = vmatpush1.xpose.msra.mxu0 0.0
        %379 = vmatprep.subr.mxu0 0.0
        %380 = vmatpush1.xpose.msra.mxu0 0.0
        %381 = vmatprep.subr.mxu0 0.0
        %382 = vmatpush1.xpose.msra.mxu0 0.0
        %383 = vmatprep.subr.mxu0 0.0
        %384 = vmatpush1.xpose.msra.mxu0 0.0
        %385 = vmatprep.subr.mxu0 0.0
        %386 = vmatpush1.xpose.msra.mxu0 0.0
        %387 = vmatprep.subr.mxu0 0.0
        %388 = vmatpush1.xpose.msra.mxu0 0.0
        %389 = vmatprep.mubr.f32.mxu0 0.0
        %v390 = vand.u32 %v319, 4294901760
        %v391 = vsub.f32 %v319, %v390
        %v392 = vand.u32 %v391, 4294901760
        %v393 = vsub.f32 %v391, %v392
        %v394 = vand.u32 %v393, 4294901760
        %395 = vmatmul.mubr.f32.gmra.mrb[0].mxu0 %v394
        %v396 = vpop.f32.mrb[0].mxu0
        %v397 = vadd.f32 0.0, %v396
        %v398 = vpop.f32.mrb[0].mxu0
        %399 = vdwg.mxu0
        %400 = vmatprep.subr.mxu0 0.0
        %v401 = vand.u32 %v322, 4294901760
        %v402 = vsub.f32 %v322, %v401
        %v403 = vand.u32 %v402, 4294901760
        %v404 = vsub.f32 %v402, %v403
        %v405 = vand.u32 %v404, 4294901760
        %406 = vmatpush1.xpose.msra.mxu0 %v405
        %407 = vmatprep.subr.mxu0 0.0
        %408 = vmatpush1.xpose.msra.mxu0 0.0
        %409 = vmatprep.subr.mxu0 0.0
        %410 = vmatpush1.xpose.msra.mxu0 0.0
        %411 = vmatprep.subr.mxu0 0.0
        %412 = vmatpush1.xpose.msra.mxu0 0.0
        %413 = vmatprep.subr.mxu0 0.0
        %414 = vmatpush1.xpose.msra.mxu0 0.0
        %415 = vmatprep.subr.mxu0 0.0
        %416 = vmatpush1.xpose.msra.mxu0 0.0
        %417 = vmatprep.subr.mxu0 0.0
        %418 = vmatpush1.xpose.msra.mxu0 0.0
        %419 = vmatprep.subr.mxu0 0.0
        %420 = vmatpush1.xpose.msra.mxu0 0.0
        %421 = vmatprep.subr.mxu0 0.0
        %422 = vmatpush1.xpose.msra.mxu0 0.0
        %423 = vmatprep.subr.mxu0 0.0
        %424 = vmatpush1.xpose.msra.mxu0 0.0
        %425 = vmatprep.subr.mxu0 0.0
        %426 = vmatpush1.xpose.msra.mxu0 0.0
        %427 = vmatprep.subr.mxu0 0.0
        %428 = vmatpush1.xpose.msra.mxu0 0.0
        %429 = vmatprep.subr.mxu0 0.0
        %430 = vmatpush1.xpose.msra.mxu0 0.0
        %431 = vmatprep.subr.mxu0 0.0
        %432 = vmatpush1.xpose.msra.mxu0 0.0
        %433 = vmatprep.subr.mxu0 0.0
        %434 = vmatpush1.xpose.msra.mxu0 0.0
        %435 = vmatprep.subr.mxu0 0.0
        %436 = vmatpush1.xpose.msra.mxu0 0.0
        %437 = vmatprep.subr.mxu0 0.0
        %438 = vmatpush1.xpose.msra.mxu0 0.0
        %439 = vmatprep.subr.mxu0 0.0
        %440 = vmatpush1.xpose.msra.mxu0 0.0
        %441 = vmatprep.subr.mxu0 0.0
        %442 = vmatpush1.xpose.msra.mxu0 0.0
        %443 = vmatprep.subr.mxu0 0.0
        %444 = vmatpush1.xpose.msra.mxu0 0.0
        %445 = vmatprep.subr.mxu0 0.0
        %446 = vmatpush1.xpose.msra.mxu0 0.0
        %447 = vmatprep.subr.mxu0 0.0
        %448 = vmatpush1.xpose.msra.mxu0 0.0
        %449 = vmatprep.subr.mxu0 0.0
        %450 = vmatpush1.xpose.msra.mxu0 0.0
        %451 = vmatprep.subr.mxu0 0.0
        %452 = vmatpush1.xpose.msra.mxu0 0.0
        %453 = vmatprep.subr.mxu0 0.0
        %454 = vmatpush1.xpose.msra.mxu0 0.0
        %455 = vmatprep.subr.mxu0 0.0
        %456 = vmatpush1.xpose.msra.mxu0 0.0
        %457 = vmatprep.subr.mxu0 0.0
        %458 = vmatpush1.xpose.msra.mxu0 0.0
        %459 = vmatprep.subr.mxu0 0.0
        %460 = vmatpush1.xpose.msra.mxu0 0.0
        %461 = vmatprep.subr.mxu0 0.0
        %462 = vmatpush1.xpose.msra.mxu0 0.0
        %463 = vmatprep.subr.mxu0 0.0
        %464 = vmatpush1.xpose.msra.mxu0 0.0
        %465 = vmatprep.subr.mxu0 0.0
        %466 = vmatpush1.xpose.msra.mxu0 0.0
        %467 = vmatprep.subr.mxu0 0.0
        %468 = vmatpush1.xpose.msra.mxu0 0.0
        %469 = vmatprep.mubr.f32.mxu0 0.0
        %v470 = vand.u32 %v319, 4294901760
        %471 = vmatmul.mubr.f32.gmra.mrb[0].mxu0 %v470
        %v472 = vpop.f32.mrb[0].mxu0
        %v473 = vadd.f32 %v397, %v472
        %v474 = vpop.f32.mrb[0].mxu0
        %475 = vdwg.mxu0
        %476 = vmatprep.subr.mxu0 0.0
        %v477 = vand.u32 %v322, 4294901760
        %v478 = vsub.f32 %v322, %v477
        %479 = vmatpush1.xpose.msra.mxu0 %v478
        %480 = vmatprep.subr.mxu0 0.0
        %481 = vmatpush1.xpose.msra.mxu0 0.0
        %482 = vmatprep.subr.mxu0 0.0
        %483 = vmatpush1.xpose.msra.mxu0 0.0
        %484 = vmatprep.subr.mxu0 0.0
        %485 = vmatpush1.xpose.msra.mxu0 0.0
        %486 = vmatprep.subr.mxu0 0.0
        %487 = vmatpush1.xpose.msra.mxu0 0.0
        %488 = vmatprep.subr.mxu0 0.0
        %489 = vmatpush1.xpose.msra.mxu0 0.0
        %490 = vmatprep.subr.mxu0 0.0
        %491 = vmatpush1.xpose.msra.mxu0 0.0
        %492 = vmatprep.subr.mxu0 0.0
        %493 = vmatpush1.xpose.msra.mxu0 0.0
        %494 = vmatprep.subr.mxu0 0.0
        %495 = vmatpush1.xpose.msra.mxu0 0.0
        %496 = vmatprep.subr.mxu0 0.0
        %497 = vmatpush1.xpose.msra.mxu0 0.0
        %498 = vmatprep.subr.mxu0 0.0
        %499 = vmatpush1.xpose.msra.mxu0 0.0
        %500 = vmatprep.subr.mxu0 0.0
        %501 = vmatpush1.xpose.msra.mxu0 0.0
        %502 = vmatprep.subr.mxu0 0.0
        %503 = vmatpush1.xpose.msra.mxu0 0.0
        %504 = vmatprep.subr.mxu0 0.0
        %505 = vmatpush1.xpose.msra.mxu0 0.0
        %506 = vmatprep.subr.mxu0 0.0
        %507 = vmatpush1.xpose.msra.mxu0 0.0
        %508 = vmatprep.subr.mxu0 0.0
        %509 = vmatpush1.xpose.msra.mxu0 0.0
        %510 = vmatprep.subr.mxu0 0.0
        %511 = vmatpush1.xpose.msra.mxu0 0.0
        %512 = vmatprep.subr.mxu0 0.0
        %513 = vmatpush1.xpose.msra.mxu0 0.0
        %514 = vmatprep.subr.mxu0 0.0
        %515 = vmatpush1.xpose.msra.mxu0 0.0
        %516 = vmatprep.subr.mxu0 0.0
        %517 = vmatpush1.xpose.msra.mxu0 0.0
        %518 = vmatprep.subr.mxu0 0.0
        %519 = vmatpush1.xpose.msra.mxu0 0.0
        %520 = vmatprep.subr.mxu0 0.0
        %521 = vmatpush1.xpose.msra.mxu0 0.0
        %522 = vmatprep.subr.mxu0 0.0
        %523 = vmatpush1.xpose.msra.mxu0 0.0
        %524 = vmatprep.subr.mxu0 0.0
        %525 = vmatpush1.xpose.msra.mxu0 0.0
        %526 = vmatprep.subr.mxu0 0.0
        %527 = vmatpush1.xpose.msra.mxu0 0.0
        %528 = vmatprep.subr.mxu0 0.0
        %529 = vmatpush1.xpose.msra.mxu0 0.0
        %530 = vmatprep.subr.mxu0 0.0
        %531 = vmatpush1.xpose.msra.mxu0 0.0
        %532 = vmatprep.subr.mxu0 0.0
        %533 = vmatpush1.xpose.msra.mxu0 0.0
        %534 = vmatprep.subr.mxu0 0.0
        %535 = vmatpush1.xpose.msra.mxu0 0.0
        %536 = vmatprep.subr.mxu0 0.0
        %537 = vmatpush1.xpose.msra.mxu0 0.0
        %538 = vmatprep.subr.mxu0 0.0
        %539 = vmatpush1.xpose.msra.mxu0 0.0
        %540 = vmatprep.subr.mxu0 0.0
        %541 = vmatpush1.xpose.msra.mxu0 0.0
        %542 = vmatprep.mubr.f32.mxu0 0.0
        %v543 = vand.u32 %v319, 4294901760
        %v544 = vsub.f32 %v319, %v543
        %545 = vmatmul.mubr.f32.gmra.mrb[0].mxu0 %v544
        %v546 = vpop.f32.mrb[0].mxu0
        %v547 = vadd.f32 %v473, %v546
        %v548 = vpop.f32.mrb[0].mxu0
        %549 = vdwg.mxu0
        %550 = vmatprep.subr.mxu0 0.0
        %v551 = vand.u32 %v322, 4294901760
        %552 = vmatpush1.xpose.msra.mxu0 %v551
        %553 = vmatprep.subr.mxu0 0.0
        %554 = vmatpush1.xpose.msra.mxu0 0.0
        %555 = vmatprep.subr.mxu0 0.0
        %556 = vmatpush1.xpose.msra.mxu0 0.0
        %557 = vmatprep.subr.mxu0 0.0
        %558 = vmatpush1.xpose.msra.mxu0 0.0
        %559 = vmatprep.subr.mxu0 0.0
        %560 = vmatpush1.xpose.msra.mxu0 0.0
        %561 = vmatprep.subr.mxu0 0.0
        %562 = vmatpush1.xpose.msra.mxu0 0.0
        %563 = vmatprep.subr.mxu0 0.0
        %564 = vmatpush1.xpose.msra.mxu0 0.0
        %565 = vmatprep.subr.mxu0 0.0
        %566 = vmatpush1.xpose.msra.mxu0 0.0
        %567 = vmatprep.subr.mxu0 0.0
        %568 = vmatpush1.xpose.msra.mxu0 0.0
        %569 = vmatprep.subr.mxu0 0.0
        %570 = vmatpush1.xpose.msra.mxu0 0.0
        %571 = vmatprep.subr.mxu0 0.0
        %572 = vmatpush1.xpose.msra.mxu0 0.0
        %573 = vmatprep.subr.mxu0 0.0
        %574 = vmatpush1.xpose.msra.mxu0 0.0
        %575 = vmatprep.subr.mxu0 0.0
        %576 = vmatpush1.xpose.msra.mxu0 0.0
        %577 = vmatprep.subr.mxu0 0.0
        %578 = vmatpush1.xpose.msra.mxu0 0.0
        %579 = vmatprep.subr.mxu0 0.0
        %580 = vmatpush1.xpose.msra.mxu0 0.0
        %581 = vmatprep.subr.mxu0 0.0
        %582 = vmatpush1.xpose.msra.mxu0 0.0
        %583 = vmatprep.subr.mxu0 0.0
        %584 = vmatpush1.xpose.msra.mxu0 0.0
        %585 = vmatprep.subr.mxu0 0.0
        %586 = vmatpush1.xpose.msra.mxu0 0.0
        %587 = vmatprep.subr.mxu0 0.0
        %588 = vmatpush1.xpose.msra.mxu0 0.0
        %589 = vmatprep.subr.mxu0 0.0
        %590 = vmatpush1.xpose.msra.mxu0 0.0
        %591 = vmatprep.subr.mxu0 0.0
        %592 = vmatpush1.xpose.msra.mxu0 0.0
        %593 = vmatprep.subr.mxu0 0.0
        %594 = vmatpush1.xpose.msra.mxu0 0.0
        %595 = vmatprep.subr.mxu0 0.0
        %596 = vmatpush1.xpose.msra.mxu0 0.0
        %597 = vmatprep.subr.mxu0 0.0
        %598 = vmatpush1.xpose.msra.mxu0 0.0
        %599 = vmatprep.subr.mxu0 0.0
        %600 = vmatpush1.xpose.msra.mxu0 0.0
        %601 = vmatprep.subr.mxu0 0.0
        %602 = vmatpush1.xpose.msra.mxu0 0.0
        %603 = vmatprep.subr.mxu0 0.0
        %604 = vmatpush1.xpose.msra.mxu0 0.0
        %605 = vmatprep.subr.mxu0 0.0
        %606 = vmatpush1.xpose.msra.mxu0 0.0
        %607 = vmatprep.subr.mxu0 0.0
        %608 = vmatpush1.xpose.msra.mxu0 0.0
        %609 = vmatprep.subr.mxu0 0.0
        %610 = vmatpush1.xpose.msra.mxu0 0.0
        %611 = vmatprep.subr.mxu0 0.0
        %612 = vmatpush1.xpose.msra.mxu0 0.0
        %613 = vmatprep.subr.mxu0 0.0
        %614 = vmatpush1.xpose.msra.mxu0 0.0
        %615 = vmatprep.mubr.f32.mxu0 0.0
        %v616 = vand.u32 %v319, 4294901760
        %v617 = vsub.f32 %v319, %v616
        %v618 = vand.u32 %v617, 4294901760
        %619 = vmatmul.mubr.f32.gmra.mrb[0].mxu0 %v618
        %v620 = vpop.f32.mrb[0].mxu0
        %v621 = vadd.f32 %v547, %v620
        %v622 = vpop.f32.mrb[0].mxu0
        %623 = vdwg.mxu0
        %624 = vmatprep.subr.mxu0 0.0
        %v625 = vand.u32 %v322, 4294901760
        %v626 = vsub.f32 %v322, %v625
        %v627 = vand.u32 %v626, 4294901760
        %628 = vmatpush1.xpose.msra.mxu0 %v627
        %629 = vmatprep.subr.mxu0 0.0
        %630 = vmatpush1.xpose.msra.mxu0 0.0
        %631 = vmatprep.subr.mxu0 0.0
        %632 = vmatpush1.xpose.msra.mxu0 0.0
        %633 = vmatprep.subr.mxu0 0.0
        %634 = vmatpush1.xpose.msra.mxu0 0.0
        %635 = vmatprep.subr.mxu0 0.0
        %636 = vmatpush1.xpose.msra.mxu0 0.0
        %637 = vmatprep.subr.mxu0 0.0
        %638 = vmatpush1.xpose.msra.mxu0 0.0
        %639 = vmatprep.subr.mxu0 0.0
        %640 = vmatpush1.xpose.msra.mxu0 0.0
        %641 = vmatprep.subr.mxu0 0.0
        %642 = vmatpush1.xpose.msra.mxu0 0.0
        %643 = vmatprep.subr.mxu0 0.0
        %644 = vmatpush1.xpose.msra.mxu0 0.0
        %645 = vmatprep.subr.mxu0 0.0
        %646 = vmatpush1.xpose.msra.mxu0 0.0
        %647 = vmatprep.subr.mxu0 0.0
        %648 = vmatpush1.xpose.msra.mxu0 0.0
        %649 = vmatprep.subr.mxu0 0.0
        %650 = vmatpush1.xpose.msra.mxu0 0.0
        %651 = vmatprep.subr.mxu0 0.0
        %652 = vmatpush1.xpose.msra.mxu0 0.0
        %653 = vmatprep.subr.mxu0 0.0
        %654 = vmatpush1.xpose.msra.mxu0 0.0
        %655 = vmatprep.subr.mxu0 0.0
        %656 = vmatpush1.xpose.msra.mxu0 0.0
        %657 = vmatprep.subr.mxu0 0.0
        %658 = vmatpush1.xpose.msra.mxu0 0.0
        %659 = vmatprep.subr.mxu0 0.0
        %660 = vmatpush1.xpose.msra.mxu0 0.0
        %661 = vmatprep.subr.mxu0 0.0
        %662 = vmatpush1.xpose.msra.mxu0 0.0
        %663 = vmatprep.subr.mxu0 0.0
        %664 = vmatpush1.xpose.msra.mxu0 0.0
        %665 = vmatprep.subr.mxu0 0.0
        %666 = vmatpush1.xpose.msra.mxu0 0.0
        %667 = vmatprep.subr.mxu0 0.0
        %668 = vmatpush1.xpose.msra.mxu0 0.0
        %669 = vmatprep.subr.mxu0 0.0
        %670 = vmatpush1.xpose.msra.mxu0 0.0
        %671 = vmatprep.subr.mxu0 0.0
        %672 = vmatpush1.xpose.msra.mxu0 0.0
        %673 = vmatprep.subr.mxu0 0.0
        %674 = vmatpush1.xpose.msra.mxu0 0.0
        %675 = vmatprep.subr.mxu0 0.0
        %676 = vmatpush1.xpose.msra.mxu0 0.0
        %677 = vmatprep.subr.mxu0 0.0
        %678 = vmatpush1.xpose.msra.mxu0 0.0
        %679 = vmatprep.subr.mxu0 0.0
        %680 = vmatpush1.xpose.msra.mxu0 0.0
        %681 = vmatprep.subr.mxu0 0.0
        %682 = vmatpush1.xpose.msra.mxu0 0.0
        %683 = vmatprep.subr.mxu0 0.0
        %684 = vmatpush1.xpose.msra.mxu0 0.0
        %685 = vmatprep.subr.mxu0 0.0
        %686 = vmatpush1.xpose.msra.mxu0 0.0
        %687 = vmatprep.subr.mxu0 0.0
        %688 = vmatpush1.xpose.msra.mxu0 0.0
        %689 = vmatprep.subr.mxu0 0.0
        %690 = vmatpush1.xpose.msra.mxu0 0.0
        %691 = vmatprep.mubr.f32.mxu0 0.0
        %v692 = vand.u32 %v319, 4294901760
        %693 = vmatmul.mubr.f32.gmra.mrb[0].mxu0 %v692
        %v694 = vpop.f32.mrb[0].mxu0
        %v695 = vadd.f32 %v621, %v694
        %v696 = vpop.f32.mrb[0].mxu0
        %697 = vdwg.mxu0
        %698 = vmatprep.subr.mxu0 0.0
        %v699 = vand.u32 %v322, 4294901760
        %700 = vmatpush1.xpose.msra.mxu0 %v699
        %701 = vmatprep.subr.mxu0 0.0
        %702 = vmatpush1.xpose.msra.mxu0 0.0
        %703 = vmatprep.subr.mxu0 0.0
        %704 = vmatpush1.xpose.msra.mxu0 0.0
        %705 = vmatprep.subr.mxu0 0.0
        %706 = vmatpush1.xpose.msra.mxu0 0.0
        %707 = vmatprep.subr.mxu0 0.0
        %708 = vmatpush1.xpose.msra.mxu0 0.0
        %709 = vmatprep.subr.mxu0 0.0
        %710 = vmatpush1.xpose.msra.mxu0 0.0
        %711 = vmatprep.subr.mxu0 0.0
        %712 = vmatpush1.xpose.msra.mxu0 0.0
        %713 = vmatprep.subr.mxu0 0.0
        %714 = vmatpush1.xpose.msra.mxu0 0.0
        %715 = vmatprep.subr.mxu0 0.0
        %716 = vmatpush1.xpose.msra.mxu0 0.0
        %717 = vmatprep.subr.mxu0 0.0
        %718 = vmatpush1.xpose.msra.mxu0 0.0
        %719 = vmatprep.subr.mxu0 0.0
        %720 = vmatpush1.xpose.msra.mxu0 0.0
        %721 = vmatprep.subr.mxu0 0.0
        %722 = vmatpush1.xpose.msra.mxu0 0.0
        %723 = vmatprep.subr.mxu0 0.0
        %724 = vmatpush1.xpose.msra.mxu0 0.0
        %725 = vmatprep.subr.mxu0 0.0
        %726 = vmatpush1.xpose.msra.mxu0 0.0
        %727 = vmatprep.subr.mxu0 0.0
        %728 = vmatpush1.xpose.msra.mxu0 0.0
        %729 = vmatprep.subr.mxu0 0.0
        %730 = vmatpush1.xpose.msra.mxu0 0.0
        %731 = vmatprep.subr.mxu0 0.0
        %732 = vmatpush1.xpose.msra.mxu0 0.0
        %733 = vmatprep.subr.mxu0 0.0
        %734 = vmatpush1.xpose.msra.mxu0 0.0
        %735 = vmatprep.subr.mxu0 0.0
        %736 = vmatpush1.xpose.msra.mxu0 0.0
        %737 = vmatprep.subr.mxu0 0.0
        %738 = vmatpush1.xpose.msra.mxu0 0.0
        %739 = vmatprep.subr.mxu0 0.0
        %740 = vmatpush1.xpose.msra.mxu0 0.0
        %741 = vmatprep.subr.mxu0 0.0
        %742 = vmatpush1.xpose.msra.mxu0 0.0
        %743 = vmatprep.subr.mxu0 0.0
        %744 = vmatpush1.xpose.msra.mxu0 0.0
        %745 = vmatprep.subr.mxu0 0.0
        %746 = vmatpush1.xpose.msra.mxu0 0.0
        %747 = vmatprep.subr.mxu0 0.0
        %748 = vmatpush1.xpose.msra.mxu0 0.0
        %749 = vmatprep.subr.mxu0 0.0
        %750 = vmatpush1.xpose.msra.mxu0 0.0
        %751 = vmatprep.subr.mxu0 0.0
        %752 = vmatpush1.xpose.msra.mxu0 0.0
        %753 = vmatprep.subr.mxu0 0.0
        %754 = vmatpush1.xpose.msra.mxu0 0.0
        %755 = vmatprep.subr.mxu0 0.0
        %756 = vmatpush1.xpose.msra.mxu0 0.0
        %757 = vmatprep.subr.mxu0 0.0
        %758 = vmatpush1.xpose.msra.mxu0 0.0
        %759 = vmatprep.subr.mxu0 0.0
        %760 = vmatpush1.xpose.msra.mxu0 0.0
        %761 = vmatprep.subr.mxu0 0.0
        %762 = vmatpush1.xpose.msra.mxu0 0.0
        %763 = vmatprep.mubr.f32.mxu0 0.0
        %v764 = vand.u32 %v319, 4294901760
        %765 = vmatmul.mubr.f32.gmra.mrb[0].mxu0 %v764
        %v766 = vpop.f32.mrb[0].mxu0
        %v767 = vadd.f32 %v695, %v766
        %v768 = vpop.f32.mrb[0].mxu0
        %769 = vdwg.mxu0
        %vm770 = vcmask 64512
        %v771 = vsel %vm770, %v767, -inf
        %772 = vmax.xlane.f32.xlu0 %v771
        %v773 = vpop.xlane.xlu0 %772
        %v774 = vsub.f32 %v767, %v773
        %v775 = vmul.f32 %v774, 1.442695
        %v776 = vpow.pop %v775
        %v777 = vsel %vm770, %v776, 0.0
        %778 = vadd.xlane.f32.xlu0 %v777
        %v779 = vpop.xlane.xlu0 %778
        %v780 = vrcp.pop %v779
        %v781 = vmul.f32 1.0, %v780
        %v782 = vmul.f32 %v776, %v781
        %v784 = vsel %vm770, %v782, 0
        %786 = vmatprep.subr.mxu0 0.0
        %v787 = vand.u32 %v316, 4294901760
        %788 = vmatpush1.msra.mxu0 %v787
        %789 = vmatprep.subr.mxu0 0.0
        %790 = vmatpush1.msra.mxu0 0.0
        %791 = vmatprep.subr.mxu0 0.0
        %792 = vmatpush1.msra.mxu0 0.0
        %793 = vmatprep.subr.mxu0 0.0
        %794 = vmatpush1.msra.mxu0 0.0
        %795 = vmatprep.subr.mxu0 0.0
        %796 = vmatpush1.msra.mxu0 0.0
        %797 = vmatprep.subr.mxu0 0.0
        %798 = vmatpush1.msra.mxu0 0.0
        %799 = vmatprep.subr.mxu0 0.0
        %800 = vmatpush1.msra.mxu0 0.0
        %801 = vmatprep.subr.mxu0 0.0
        %802 = vmatpush1.msra.mxu0 0.0
        %803 = vmatprep.subr.mxu0 0.0
        %804 = vmatpush1.msra.mxu0 0.0
        %805 = vmatprep.subr.mxu0 0.0
        %806 = vmatpush1.msra.mxu0 0.0
        %807 = vmatprep.subr.mxu0 0.0
        %808 = vmatpush1.msra.mxu0 0.0
        %809 = vmatprep.subr.mxu0 0.0
        %810 = vmatpush1.msra.mxu0 0.0
        %811 = vmatprep.subr.mxu0 0.0
        %812 = vmatpush1.msra.mxu0 0.0
        %813 = vmatprep.subr.mxu0 0.0
        %814 = vmatpush1.msra.mxu0 0.0
        %815 = vmatprep.subr.mxu0 0.0
        %816 = vmatpush1.msra.mxu0 0.0
        %817 = vmatprep.subr.mxu0 0.0
        %818 = vmatpush1.msra.mxu0 0.0
        %819 = vmatprep.subr.mxu0 0.0
        %820 = vmatpush1.msra.mxu0 0.0
        %821 = vmatprep.subr.mxu0 0.0
        %822 = vmatpush1.msra.mxu0 0.0
        %823 = vmatprep.subr.mxu0 0.0
        %824 = vmatpush1.msra.mxu0 0.0
        %825 = vmatprep.subr.mxu0 0.0
        %826 = vmatpush1.msra.mxu0 0.0
        %827 = vmatprep.subr.mxu0 0.0
        %828 = vmatpush1.msra.mxu0 0.0
        %829 = vmatprep.subr.mxu0 0.0
        %830 = vmatpush1.msra.mxu0 0.0
        %831 = vmatprep.subr.mxu0 0.0
        %832 = vmatpush1.msra.mxu0 0.0
        %833 = vmatprep.subr.mxu0 0.0
        %834 = vmatpush1.msra.mxu0 0.0
        %835 = vmatprep.subr.mxu0 0.0
        %836 = vmatpush1.msra.mxu0 0.0
        %837 = vmatprep.subr.mxu0 0.0
        %838 = vmatpush1.msra.mxu0 0.0
        %839 = vmatprep.subr.mxu0 0.0
        %840 = vmatpush1.msra.mxu0 0.0
        %841 = vmatprep.subr.mxu0 0.0
        %842 = vmatpush1.msra.mxu0 0.0
        %843 = vmatprep.subr.mxu0 0.0
        %844 = vmatpush1.msra.mxu0 0.0
        %845 = vmatprep.subr.mxu0 0.0
        %846 = vmatpush1.msra.mxu0 0.0
        %847 = vmatprep.subr.mxu0 0.0
        %848 = vmatpush1.msra.mxu0 0.0
        %849 = vmatprep.subr.mxu0 0.0
        %850 = vmatpush1.msra.mxu0 0.0
        %851 = vmatprep.mubr.f32.mxu0 0.0
        %v852 = vand.u32 %v784, 4294901760
        %v853 = vsub.f32 %v784, %v852
        %v854 = vand.u32 %v853, 4294901760
        %v855 = vsub.f32 %v853, %v854
        %v856 = vand.u32 %v855, 4294901760
        %857 = vmatmul.mubr.f32.gmra.mrb[0].mxu0 %v856
        %v858 = vpop.f32.mrb[0].mxu0
        %v859 = vadd.f32 0.0, %v858
        %v860 = vpop.f32.mrb[0].mxu0
        %861 = vdwg.mxu0
        %862 = vmatprep.subr.mxu0 0.0
        %v863 = vand.u32 %v316, 4294901760
        %v864 = vsub.f32 %v316, %v863
        %v865 = vand.u32 %v864, 4294901760
        %v866 = vsub.f32 %v864, %v865
        %v867 = vand.u32 %v866, 4294901760
        %868 = vmatpush1.msra.mxu0 %v867
        %869 = vmatprep.subr.mxu0 0.0
        %870 = vmatpush1.msra.mxu0 0.0
        %871 = vmatprep.subr.mxu0 0.0
        %872 = vmatpush1.msra.mxu0 0.0
        %873 = vmatprep.subr.mxu0 0.0
        %874 = vmatpush1.msra.mxu0 0.0
        %875 = vmatprep.subr.mxu0 0.0
        %876 = vmatpush1.msra.mxu0 0.0
        %877 = vmatprep.subr.mxu0 0.0
        %878 = vmatpush1.msra.mxu0 0.0
        %879 = vmatprep.subr.mxu0 0.0
        %880 = vmatpush1.msra.mxu0 0.0
        %881 = vmatprep.subr.mxu0 0.0
        %882 = vmatpush1.msra.mxu0 0.0
        %883 = vmatprep.subr.mxu0 0.0
        %884 = vmatpush1.msra.mxu0 0.0
        %885 = vmatprep.subr.mxu0 0.0
        %886 = vmatpush1.msra.mxu0 0.0
        %887 = vmatprep.subr.mxu0 0.0
        %888 = vmatpush1.msra.mxu0 0.0
        %889 = vmatprep.subr.mxu0 0.0
        %890 = vmatpush1.msra.mxu0 0.0
        %891 = vmatprep.subr.mxu0 0.0
        %892 = vmatpush1.msra.mxu0 0.0
        %893 = vmatprep.subr.mxu0 0.0
        %894 = vmatpush1.msra.mxu0 0.0
        %895 = vmatprep.subr.mxu0 0.0
        %896 = vmatpush1.msra.mxu0 0.0
        %897 = vmatprep.subr.mxu0 0.0
        %898 = vmatpush1.msra.mxu0 0.0
        %899 = vmatprep.subr.mxu0 0.0
        %900 = vmatpush1.msra.mxu0 0.0
        %901 = vmatprep.subr.mxu0 0.0
        %902 = vmatpush1.msra.mxu0 0.0
        %903 = vmatprep.subr.mxu0 0.0
        %904 = vmatpush1.msra.mxu0 0.0
        %905 = vmatprep.subr.mxu0 0.0
        %906 = vmatpush1.msra.mxu0 0.0
        %907 = vmatprep.subr.mxu0 0.0
        %908 = vmatpush1.msra.mxu0 0.0
        %909 = vmatprep.subr.mxu0 0.0
        %910 = vmatpush1.msra.mxu0 0.0
        %911 = vmatprep.subr.mxu0 0.0
        %912 = vmatpush1.msra.mxu0 0.0
        %913 = vmatprep.subr.mxu0 0.0
        %914 = vmatpush1.msra.mxu0 0.0
        %915 = vmatprep.subr.mxu0 0.0
        %916 = vmatpush1.msra.mxu0 0.0
        %917 = vmatprep.subr.mxu0 0.0
        %918 = vmatpush1.msra.mxu0 0.0
        %919 = vmatprep.subr.mxu0 0.0
        %920 = vmatpush1.msra.mxu0 0.0
        %921 = vmatprep.subr.mxu0 0.0
        %922 = vmatpush1.msra.mxu0 0.0
        %923 = vmatprep.subr.mxu0 0.0
        %924 = vmatpush1.msra.mxu0 0.0
        %925 = vmatprep.subr.mxu0 0.0
        %926 = vmatpush1.msra.mxu0 0.0
        %927 = vmatprep.subr.mxu0 0.0
        %928 = vmatpush1.msra.mxu0 0.0
        %929 = vmatprep.subr.mxu0 0.0
        %930 = vmatpush1.msra.mxu0 0.0
        %931 = vmatprep.mubr.f32.mxu0 0.0
        %v932 = vand.u32 %v784, 4294901760
        %933 = vmatmul.mubr.f32.gmra.mrb[0].mxu0 %v932
        %v934 = vpop.f32.mrb[0].mxu0
        %v935 = vadd.f32 %v859, %v934
        %v936 = vpop.f32.mrb[0].mxu0
        %937 = vdwg.mxu0
        %938 = vmatprep.subr.mxu0 0.0
        %v939 = vand.u32 %v316, 4294901760
        %v940 = vsub.f32 %v316, %v939
        %941 = vmatpush1.msra.mxu0 %v940
        %942 = vmatprep.subr.mxu0 0.0
        %943 = vmatpush1.msra.mxu0 0.0
        %944 = vmatprep.subr.mxu0 0.0
        %945 = vmatpush1.msra.mxu0 0.0
        %946 = vmatprep.subr.mxu0 0.0
        %947 = vmatpush1.msra.mxu0 0.0
        %948 = vmatprep.subr.mxu0 0.0
        %949 = vmatpush1.msra.mxu0 0.0
        %950 = vmatprep.subr.mxu0 0.0
        %951 = vmatpush1.msra.mxu0 0.0
        %952 = vmatprep.subr.mxu0 0.0
        %953 = vmatpush1.msra.mxu0 0.0
        %954 = vmatprep.subr.mxu0 0.0
        %955 = vmatpush1.msra.mxu0 0.0
        %956 = vmatprep.subr.mxu0 0.0
        %957 = vmatpush1.msra.mxu0 0.0
        %958 = vmatprep.subr.mxu0 0.0
        %959 = vmatpush1.msra.mxu0 0.0
        %960 = vmatprep.subr.mxu0 0.0
        %961 = vmatpush1.msra.mxu0 0.0
        %962 = vmatprep.subr.mxu0 0.0
        %963 = vmatpush1.msra.mxu0 0.0
        %964 = vmatprep.subr.mxu0 0.0
        %965 = vmatpush1.msra.mxu0 0.0
        %966 = vmatprep.subr.mxu0 0.0
        %967 = vmatpush1.msra.mxu0 0.0
        %968 = vmatprep.subr.mxu0 0.0
        %969 = vmatpush1.msra.mxu0 0.0
        %970 = vmatprep.subr.mxu0 0.0
        %971 = vmatpush1.msra.mxu0 0.0
        %972 = vmatprep.subr.mxu0 0.0
        %973 = vmatpush1.msra.mxu0 0.0
        %974 = vmatprep.subr.mxu0 0.0
        %975 = vmatpush1.msra.mxu0 0.0
        %976 = vmatprep.subr.mxu0 0.0
        %977 = vmatpush1.msra.mxu0 0.0
        %978 = vmatprep.subr.mxu0 0.0
        %979 = vmatpush1.msra.mxu0 0.0
        %980 = vmatprep.subr.mxu0 0.0
        %981 = vmatpush1.msra.mxu0 0.0
        %982 = vmatprep.subr.mxu0 0.0
        %983 = vmatpush1.msra.mxu0 0.0
        %984 = vmatprep.subr.mxu0 0.0
        %985 = vmatpush1.msra.mxu0 0.0
        %986 = vmatprep.subr.mxu0 0.0
        %987 = vmatpush1.msra.mxu0 0.0
        %988 = vmatprep.subr.mxu0 0.0
        %989 = vmatpush1.msra.mxu0 0.0
        %990 = vmatprep.subr.mxu0 0.0
        %991 = vmatpush1.msra.mxu0 0.0
        %992 = vmatprep.subr.mxu0 0.0
        %993 = vmatpush1.msra.mxu0 0.0
        %994 = vmatprep.subr.mxu0 0.0
        %995 = vmatpush1.msra.mxu0 0.0
        %996 = vmatprep.subr.mxu0 0.0
        %997 = vmatpush1.msra.mxu0 0.0
        %998 = vmatprep.subr.mxu0 0.0
        %999 = vmatpush1.msra.mxu0 0.0
        %1000 = vmatprep.subr.mxu0 0.0
        %1001 = vmatpush1.msra.mxu0 0.0
        %1002 = vmatprep.subr.mxu0 0.0
        %1003 = vmatpush1.msra.mxu0 0.0
        %1004 = vmatprep.mubr.f32.mxu0 0.0
        %v1005 = vand.u32 %v784, 4294901760
        %v1006 = vsub.f32 %v784, %v1005
        %1007 = vmatmul.mubr.f32.gmra.mrb[0].mxu0 %v1006
        %v1008 = vpop.f32.mrb[0].mxu0
        %v1009 = vadd.f32 %v935, %v1008
        %v1010 = vpop.f32.mrb[0].mxu0
        %1011 = vdwg.mxu0
        %1012 = vmatprep.subr.mxu0 0.0
        %v1013 = vand.u32 %v316, 4294901760
        %1014 = vmatpush1.msra.mxu0 %v1013
        %1015 = vmatprep.subr.mxu0 0.0
        %1016 = vmatpush1.msra.mxu0 0.0
        %1017 = vmatprep.subr.mxu0 0.0
        %1018 = vmatpush1.msra.mxu0 0.0
        %1019 = vmatprep.subr.mxu0 0.0
        %1020 = vmatpush1.msra.mxu0 0.0
        %1021 = vmatprep.subr.mxu0 0.0
        %1022 = vmatpush1.msra.mxu0 0.0
        %1023 = vmatprep.subr.mxu0 0.0
        %1024 = vmatpush1.msra.mxu0 0.0
        %1025 = vmatprep.subr.mxu0 0.0
        %1026 = vmatpush1.msra.mxu0 0.0
        %1027 = vmatprep.subr.mxu0 0.0
        %1028 = vmatpush1.msra.mxu0 0.0
        %1029 = vmatprep.subr.mxu0 0.0
        %1030 = vmatpush1.msra.mxu0 0.0
        %1031 = vmatprep.subr.mxu0 0.0
        %1032 = vmatpush1.msra.mxu0 0.0
        %1033 = vmatprep.subr.mxu0 0.0
        %1034 = vmatpush1.msra.mxu0 0.0
        %1035 = vmatprep.subr.mxu0 0.0
        %1036 = vmatpush1.msra.mxu0 0.0
        %1037 = vmatprep.subr.mxu0 0.0
        %1038 = vmatpush1.msra.mxu0 0.0
        %1039 = vmatprep.subr.mxu0 0.0
        %1040 = vmatpush1.msra.mxu0 0.0
        %1041 = vmatprep.subr.mxu0 0.0
        %1042 = vmatpush1.msra.mxu0 0.0
        %1043 = vmatprep.subr.mxu0 0.0
        %1044 = vmatpush1.msra.mxu0 0.0
        %1045 = vmatprep.subr.mxu0 0.0
        %1046 = vmatpush1.msra.mxu0 0.0
        %1047 = vmatprep.subr.mxu0 0.0
        %1048 = vmatpush1.msra.mxu0 0.0
        %1049 = vmatprep.subr.mxu0 0.0
        %1050 = vmatpush1.msra.mxu0 0.0
        %1051 = vmatprep.subr.mxu0 0.0
        %1052 = vmatpush1.msra.mxu0 0.0
        %1053 = vmatprep.subr.mxu0 0.0
        %1054 = vmatpush1.msra.mxu0 0.0
        %1055 = vmatprep.subr.mxu0 0.0
        %1056 = vmatpush1.msra.mxu0 0.0
        %1057 = vmatprep.subr.mxu0 0.0
        %1058 = vmatpush1.msra.mxu0 0.0
        %1059 = vmatprep.subr.mxu0 0.0
        %1060 = vmatpush1.msra.mxu0 0.0
        %1061 = vmatprep.subr.mxu0 0.0
        %1062 = vmatpush1.msra.mxu0 0.0
        %1063 = vmatprep.subr.mxu0 0.0
        %1064 = vmatpush1.msra.mxu0 0.0
        %1065 = vmatprep.subr.mxu0 0.0
        %1066 = vmatpush1.msra.mxu0 0.0
        %1067 = vmatprep.subr.mxu0 0.0
        %1068 = vmatpush1.msra.mxu0 0.0
        %1069 = vmatprep.subr.mxu0 0.0
        %1070 = vmatpush1.msra.mxu0 0.0
        %1071 = vmatprep.subr.mxu0 0.0
        %1072 = vmatpush1.msra.mxu0 0.0
        %1073 = vmatprep.subr.mxu0 0.0
        %1074 = vmatpush1.msra.mxu0 0.0
        %1075 = vmatprep.subr.mxu0 0.0
        %1076 = vmatpush1.msra.mxu0 0.0
        %1077 = vmatprep.mubr.f32.mxu0 0.0
        %v1078 = vand.u32 %v784, 4294901760
        %v1079 = vsub.f32 %v784, %v1078
        %v1080 = vand.u32 %v1079, 4294901760
        %1081 = vmatmul.mubr.f32.gmra.mrb[0].mxu0 %v1080
        %v1082 = vpop.f32.mrb[0].mxu0
        %v1083 = vadd.f32 %v1009, %v1082
        %v1084 = vpop.f32.mrb[0].mxu0
        %1085 = vdwg.mxu0
        %1086 = vmatprep.subr.mxu0 0.0
        %v1087 = vand.u32 %v316, 4294901760
        %v1088 = vsub.f32 %v316, %v1087
        %v1089 = vand.u32 %v1088, 4294901760
        %1090 = vmatpush1.msra.mxu0 %v1089
        %1091 = vmatprep.subr.mxu0 0.0
        %1092 = vmatpush1.msra.mxu0 0.0
        %1093 = vmatprep.subr.mxu0 0.0
        %1094 = vmatpush1.msra.mxu0 0.0
        %1095 = vmatprep.subr.mxu0 0.0
        %1096 = vmatpush1.msra.mxu0 0.0
        %1097 = vmatprep.subr.mxu0 0.0
        %1098 = vmatpush1.msra.mxu0 0.0
        %1099 = vmatprep.subr.mxu0 0.0
        %1100 = vmatpush1.msra.mxu0 0.0
        %1101 = vmatprep.subr.mxu0 0.0
        %1102 = vmatpush1.msra.mxu0 0.0
        %1103 = vmatprep.subr.mxu0 0.0
        %1104 = vmatpush1.msra.mxu0 0.0
        %1105 = vmatprep.subr.mxu0 0.0
        %1106 = vmatpush1.msra.mxu0 0.0
        %1107 = vmatprep.subr.mxu0 0.0
        %1108 = vmatpush1.msra.mxu0 0.0
        %1109 = vmatprep.subr.mxu0 0.0
        %1110 = vmatpush1.msra.mxu0 0.0
        %1111 = vmatprep.subr.mxu0 0.0
        %1112 = vmatpush1.msra.mxu0 0.0
        %1113 = vmatprep.subr.mxu0 0.0
        %1114 = vmatpush1.msra.mxu0 0.0
        %1115 = vmatprep.subr.mxu0 0.0
        %1116 = vmatpush1.msra.mxu0 0.0
        %1117 = vmatprep.subr.mxu0 0.0
        %1118 = vmatpush1.msra.mxu0 0.0
        %1119 = vmatprep.subr.mxu0 0.0
        %1120 = vmatpush1.msra.mxu0 0.0
        %1121 = vmatprep.subr.mxu0 0.0
        %1122 = vmatpush1.msra.mxu0 0.0
        %1123 = vmatprep.subr.mxu0 0.0
        %1124 = vmatpush1.msra.mxu0 0.0
        %1125 = vmatprep.subr.mxu0 0.0
        %1126 = vmatpush1.msra.mxu0 0.0
        %1127 = vmatprep.subr.mxu0 0.0
        %1128 = vmatpush1.msra.mxu0 0.0
        %1129 = vmatprep.subr.mxu0 0.0
        %1130 = vmatpush1.msra.mxu0 0.0
        %1131 = vmatprep.subr.mxu0 0.0
        %1132 = vmatpush1.msra.mxu0 0.0
        %1133 = vmatprep.subr.mxu0 0.0
        %1134 = vmatpush1.msra.mxu0 0.0
        %1135 = vmatprep.subr.mxu0 0.0
        %1136 = vmatpush1.msra.mxu0 0.0
        %1137 = vmatprep.subr.mxu0 0.0
        %1138 = vmatpush1.msra.mxu0 0.0
        %1139 = vmatprep.subr.mxu0 0.0
        %1140 = vmatpush1.msra.mxu0 0.0
        %1141 = vmatprep.subr.mxu0 0.0
        %1142 = vmatpush1.msra.mxu0 0.0
        %1143 = vmatprep.subr.mxu0 0.0
        %1144 = vmatpush1.msra.mxu0 0.0
        %1145 = vmatprep.subr.mxu0 0.0
        %1146 = vmatpush1.msra.mxu0 0.0
        %1147 = vmatprep.subr.mxu0 0.0
        %1148 = vmatpush1.msra.mxu0 0.0
        %1149 = vmatprep.subr.mxu0 0.0
        %1150 = vmatpush1.msra.mxu0 0.0
        %1151 = vmatprep.subr.mxu0 0.0
        %1152 = vmatpush1.msra.mxu0 0.0
        %1153 = vmatprep.mubr.f32.mxu0 0.0
        %v1154 = vand.u32 %v784, 4294901760
        %1155 = vmatmul.mubr.f32.gmra.mrb[0].mxu0 %v1154
        %v1156 = vpop.f32.mrb[0].mxu0
        %v1157 = vadd.f32 %v1083, %v1156
        %v1158 = vpop.f32.mrb[0].mxu0
        %1159 = vdwg.mxu0
        %1160 = vmatprep.subr.mxu0 0.0
        %v1161 = vand.u32 %v316, 4294901760
        %1162 = vmatpush1.msra.mxu0 %v1161
        %1163 = vmatprep.subr.mxu0 0.0
        %1164 = vmatpush1.msra.mxu0 0.0
        %1165 = vmatprep.subr.mxu0 0.0
        %1166 = vmatpush1.msra.mxu0 0.0
        %1167 = vmatprep.subr.mxu0 0.0
        %1168 = vmatpush1.msra.mxu0 0.0
        %1169 = vmatprep.subr.mxu0 0.0
        %1170 = vmatpush1.msra.mxu0 0.0
        %1171 = vmatprep.subr.mxu0 0.0
        %1172 = vmatpush1.msra.mxu0 0.0
        %1173 = vmatprep.subr.mxu0 0.0
        %1174 = vmatpush1.msra.mxu0 0.0
        %1175 = vmatprep.subr.mxu0 0.0
        %1176 = vmatpush1.msra.mxu0 0.0
        %1177 = vmatprep.subr.mxu0 0.0
        %1178 = vmatpush1.msra.mxu0 0.0
        %1179 = vmatprep.subr.mxu0 0.0
        %1180 = vmatpush1.msra.mxu0 0.0
        %1181 = vmatprep.subr.mxu0 0.0
        %1182 = vmatpush1.msra.mxu0 0.0
        %1183 = vmatprep.subr.mxu0 0.0
        %1184 = vmatpush1.msra.mxu0 0.0
        %1185 = vmatprep.subr.mxu0 0.0
        %1186 = vmatpush1.msra.mxu0 0.0
        %1187 = vmatprep.subr.mxu0 0.0
        %1188 = vmatpush1.msra.mxu0 0.0
        %1189 = vmatprep.subr.mxu0 0.0
        %1190 = vmatpush1.msra.mxu0 0.0
        %1191 = vmatprep.subr.mxu0 0.0
        %1192 = vmatpush1.msra.mxu0 0.0
        %1193 = vmatprep.subr.mxu0 0.0
        %1194 = vmatpush1.msra.mxu0 0.0
        %1195 = vmatprep.subr.mxu0 0.0
        %1196 = vmatpush1.msra.mxu0 0.0
        %1197 = vmatprep.subr.mxu0 0.0
        %1198 = vmatpush1.msra.mxu0 0.0
        %1199 = vmatprep.subr.mxu0 0.0
        %1200 = vmatpush1.msra.mxu0 0.0
        %1201 = vmatprep.subr.mxu0 0.0
        %1202 = vmatpush1.msra.mxu0 0.0
        %1203 = vmatprep.subr.mxu0 0.0
        %1204 = vmatpush1.msra.mxu0 0.0
        %1205 = vmatprep.subr.mxu0 0.0
        %1206 = vmatpush1.msra.mxu0 0.0
        %1207 = vmatprep.subr.mxu0 0.0
        %1208 = vmatpush1.msra.mxu0 0.0
        %1209 = vmatprep.subr.mxu0 0.0
        %1210 = vmatpush1.msra.mxu0 0.0
        %1211 = vmatprep.subr.mxu0 0.0
        %1212 = vmatpush1.msra.mxu0 0.0
        %1213 = vmatprep.subr.mxu0 0.0
        %1214 = vmatpush1.msra.mxu0 0.0
        %1215 = vmatprep.subr.mxu0 0.0
        %1216 = vmatpush1.msra.mxu0 0.0
        %1217 = vmatprep.subr.mxu0 0.0
        %1218 = vmatpush1.msra.mxu0 0.0
        %1219 = vmatprep.subr.mxu0 0.0
        %1220 = vmatpush1.msra.mxu0 0.0
        %1221 = vmatprep.subr.mxu0 0.0
        %1222 = vmatpush1.msra.mxu0 0.0
        %1223 = vmatprep.subr.mxu0 0.0
        %1224 = vmatpush1.msra.mxu0 0.0
        %1225 = vmatprep.mubr.f32.mxu0 0.0
        %v1226 = vand.u32 %v784, 4294901760
        %1227 = vmatmul.mubr.f32.gmra.mrb[0].mxu0 %v1226
        %v1228 = vpop.f32.mrb[0].mxu0
        %v1229 = vadd.f32 %v1157, %v1228
        %v1230 = vpop.f32.mrb[0].mxu0
        %1231 = vdwg.mxu0
        %1232 = vst.msk [vmem:[%s313] sm:$0xff] %vm770, %v782
        %1233 = vst.msk [vmem:[%s306] sm:$0xff] %vm317, %v1229
        %s1234 = sand.u32 %s130, 1
        %s1235 = scalar_lea.sflag [#allocation4], %s1234
        %s1236 = sand.u32 %s130, 1
        %s1237 = smul.addr %s1236, 8
        %s1238 = scalar_lea.vmem [#allocation8], %s1237
        %s1239 = sand.u32 %s158, 1
        %s1240 = scalar_lea.sflag [#allocation10], %s1239
        %s1241 = sand.u32 %s158, 1
        %s1242 = smul.addr %s1241, 8
        %s1243 = scalar_lea.vmem [#allocation9], %s1242
        // Predicated region
        $region45: #{tpu_custom_call.1} parent=31 // pred_check
          %p1244 = pneg %p140
        $region46: #{tpu_custom_call.1} parent=31 // pred_check_branch
          %1246 = sbr.rel (%p1244) target = $region48
        $region47: #{tpu_custom_call.1} parent=31 // pred_region
          %s1248 = ssub.s32 128, 128
          %1249 = vsyncadd %s1235, %s1248
          %s1250 = sadd.s32 %s33, %s32
          %s1251 = smul.addr %s1250, 128
          %s1252 = scalar_lea.hbm %s3, %s1251
          %s1254 = sshll.u32 %s1238, 4
          %s1255 = int_to_ptr.vmem [resolvable:$true] %s1254
          %1257 = dma.vmem_to_hbm [thread:$0]  %s1255, 128, %s1252, %s1235
        $region48: #{tpu_custom_call.1} parent=31 // pred_fallthru
          _
        // Predicated region
        $region49: #{tpu_custom_call.1} parent=31 // pred_check
          %p1258 = pneg %p168
        $region50: #{tpu_custom_call.1} parent=31 // pred_check_branch
          %1260 = sbr.rel (%p1258) target = $region52
        $region51: #{tpu_custom_call.1} parent=31 // pred_region
          %s1262 = ssub.s32 128, 128
          %1263 = vsyncadd %s1240, %s1262
          %s1264 = sadd.s32 %s33, %s32
          %s1265 = smul.addr %s1264, 128
          %s1266 = scalar_lea.hbm %s4, %s1265
          %s1268 = sshll.u32 %s1243, 4
          %s1269 = int_to_ptr.vmem [resolvable:$true] %s1268
          %1271 = dma.vmem_to_hbm [thread:$0]  %s1269, 128, %s1266, %s1240
        $region52: #{tpu_custom_call.1} parent=31 // pred_fallthru
          _
      $region32: #{tpu_custom_call.1} parent=5 // pred_fallthru
        _
      %p1272 = scmp.le.s32.totalorder 2, %s23
      // Predicated region
      $region53: #{tpu_custom_call.1} parent=5 // pred_check
        %p1273 = pneg %p1272
      $region54: #{tpu_custom_call.1} parent=5 // pred_check_branch
        %1275 = sbr.rel (%p1273) target = $region56
      $region55: #{tpu_custom_call.1} parent=5 // pred_region
        %s1276 = ssub.s32 %s23, 2
        // Predicated region
        $region57: #{tpu_custom_call.1} parent=55 // pred_check
          %p1277 = pneg %p146
        $region58: #{tpu_custom_call.1} parent=55 // pred_check_branch
          %1279 = sbr.rel (%p1277) target = $region60
        $region59: #{tpu_custom_call.1} parent=55 // pred_region
          %s1280 = sand.u32 %s131, 1
          %s1281 = scalar_lea.sflag [#allocation4], %s1280
          %s1282 = sand.u32 %s131, 1
          %s1283 = smul.addr %s1282, 8
          %s1284 = scalar_lea.vmem [#allocation8], %s1283
          %1285 = dma.done %s1281, 128
        $region60: #{tpu_custom_call.1} parent=55 // pred_fallthru
          _
        // Predicated region
        $region61: #{tpu_custom_call.1} parent=55 // pred_check
          %p1286 = pneg %p174
        $region62: #{tpu_custom_call.1} parent=55 // pred_check_branch
          %1288 = sbr.rel (%p1286) target = $region64
        $region63: #{tpu_custom_call.1} parent=55 // pred_region
          %s1289 = sand.u32 %s159, 1
          %s1290 = scalar_lea.sflag [#allocation10], %s1289
          %s1291 = sand.u32 %s159, 1
          %s1292 = smul.addr %s1291, 8
          %s1293 = scalar_lea.vmem [#allocation9], %s1292
          %1294 = dma.done %s1290, 128
        $region64: #{tpu_custom_call.1} parent=55 // pred_fallthru
          _
      $region56: #{tpu_custom_call.1} parent=5 // pred_fallthru
        _
    $region6: #{tpu_custom_call.1} parent=1 // loop_footer
      %s27 = sadd.s32 1, %s23
    $region7: #{tpu_custom_call.1} parent=1 // loop_footer_branch
      %22 = sbr.rel target = $region3
    $region8: #{tpu_custom_call.1} parent=1 // loop_exit
      _
    %1295 = vsyncpa [#allocation3], 1
    %s1296 = scalar_lea.sflag [#allocation3], 1
    %1297 = vsyncpa %s1296, 1
    %1298 = vsyncpa [#allocation6], 1
    %s1299 = scalar_lea.sflag [#allocation6], 1
    %1300 = vsyncpa %s1299, 1
    %1301 = vsyncpa [#allocation4], 1
    %s1302 = scalar_lea.sflag [#allocation4], 1
    %1303 = vsyncpa %s1302, 1
    %1304 = vsyncpa [#allocation10], 1
    %s1305 = scalar_lea.sflag [#allocation10], 1
    %1306 = vsyncpa %s1305, 1

</llo_original>
